<compile_context>
chip_gen: v7x
topology: tpu7x:2x2x1
jax: 0.10.0
libtpu: 0.0.40
codegen_flags: <defaults>
</compile_context>

<pallas_src>
import functools
import math

import jax
import jax.numpy as jnp
import numpy as np
from jax import lax
from jax.experimental import pallas as pl
from jax.experimental.pallas import tpu as pltpu

# obj-map pad value: BCE(_PAD_NEG, 0) == 0 exactly in f32 -> pads contribute 0.
_PAD_NEG = -60.0


def _cdiv(a, b):
    return -(-a // b)


def _round_up(a, m):
    return _cdiv(a, m) * m


# ----------------------------- in-kernel helpers -----------------------------

def _bce_with_logits(x, z):
    # PyTorch BCEWithLogitsLoss (pos_weight = 1), numerically stable form.
    return jnp.maximum(x, 0.0) - x * z + jnp.log(1.0 + jnp.exp(-jnp.abs(x)))


def _bce_zero_target(x):
    # BCE-with-logits against an all-zero target; depends on x only.
    return jnp.maximum(x, 0.0) + jnp.log(1.0 + jnp.exp(-jnp.abs(x)))


def _fast_recip(x):
    # EUP approximate reciprocal + one Newton step (~f32-exact); keeps the
    # divide chain off the VALU critical slot.
    r = pl.reciprocal(x, approx=True)
    return r * (2.0 - x * r)


def _atan_pos(x):
    # arctan(x) for x >= 0 using sqrt/select/poly only: two half-angle
    # reductions + degree-9 Taylor polynomial (~1e-7 abs err).
    inv = x > 1.0
    t = jnp.where(inv, _fast_recip(jnp.maximum(x, 1e-30)), x)
    t = t * _fast_recip(1.0 + jnp.sqrt(1.0 + t * t))
    t = t * _fast_recip(1.0 + jnp.sqrt(1.0 + t * t))
    t2 = t * t
    p = t * (1.0 + t2 * (-1.0 / 3.0 + t2 * (1.0 / 5.0
                                            + t2 * (-1.0 / 7.0 + t2 / 9.0))))
    a = 4.0 * p
    return jnp.where(inv, jnp.pi * 0.5 - a, a)


# ------------------------------- Pallas kernels -------------------------------

def _matched_kernel(d_ref, out_ref, *, no, nc, gr):
    """Box decode + CIoU + class BCE + objectness-target correction.

    Input block d_ref is (14+2C, 8, 128): attributes on the leading axis, 1024
    matches per grid step laid out sublane/lane-dense (8,128).  Rows:
      0:4 box logits | 4 obj logit | 5:5+C cls logits | no:no+4 tbox |
      no+4:no+6 anchor | no+6:no+6+C tcls | no+6+C wbox | no+7+C wcls | no+8+C wobj
    Output (3,8,128) lane-dense partial sums [box, cls, obj], resident across
    the grid; reduced to scalars by a tiny jnp.sum in JAX.
    """
    r = pl.program_id(0)

    @pl.when(r == 0)
    def _():
        out_ref[...] = jnp.zeros_like(out_ref)

    eps = 1e-9
    pxy_l = d_ref[0:2]                       # (2, 8, 128)
    pwh_l = d_ref[2:4]
    x_obj = d_ref[4]                         # (8, 128)
    txy = d_ref[no:no + 2]
    twh = d_ref[no + 2:no + 4]
    anc = d_ref[no + 4:no + 6]
    wbox = d_ref[no + 6 + nc]
    wcls = d_ref[no + 7 + nc]
    wobj = d_ref[no + 8 + nc]

    pxy = jax.nn.sigmoid(pxy_l) * 2.0 - 0.5
    pwh = (jax.nn.sigmoid(pwh_l) * 2.0) ** 2 * anc

    # Vectorized over the (x,y) coordinate pair on the leading axis.
    b1_lo, b1_hi = pxy - pwh * 0.5, pxy + pwh * 0.5
    b2_lo, b2_hi = txy - twh * 0.5, txy + twh * 0.5

    iwh = jnp.maximum(jnp.minimum(b1_hi, b2_hi) - jnp.maximum(b1_lo, b2_lo), 0.0)
    inter = iwh[0] * iwh[1]
    w1, h1 = pwh[0], pwh[1] + eps
    w2, h2 = twh[0], twh[1] + eps
    union = w1 * h1 + w2 * h2 - inter + eps
    iou = inter * _fast_recip(union)

    cwh = jnp.maximum(b1_hi, b2_hi) - jnp.minimum(b1_lo, b2_lo)
    c2 = cwh[0] * cwh[0] + cwh[1] * cwh[1] + eps
    dc = (b2_lo + b2_hi) - (b1_lo + b1_hi)
    rho2 = (dc[0] * dc[0] + dc[1] * dc[1]) * 0.25

    # Single arctan via atan(a)-atan(b) = atan((a-b)/(1+ab)) for a,b>0; the
    # result is squared so odd symmetry lets us drop the sign entirely.
    arg = jnp.abs(w2 * h1 - w1 * h2) * _fast_recip(h1 * h2 + w1 * w2)
    at = _atan_pos(arg)
    v = (4.0 / (jnp.pi ** 2)) * at * at
    alpha = v * _fast_recip(v - iou + (1.0 + eps))
    ciou = iou - (rho2 * _fast_recip(c2) + v * alpha)      # (8, 128)

    valid = wobj > 0.0                                     # padded lanes -> 0
    lbox = jnp.where(valid, wbox * (1.0 - ciou), 0.0)
    # Objectness correction: BCE(x, t) - BCE(x, 0) == -x * t (unique matches).
    t_obj = (1.0 - gr) + gr * jnp.maximum(ciou, 0.0)
    lobj = jnp.where(valid, wobj * (-x_obj * t_obj), 0.0)

    out_ref[0, :, :] += lbox
    out_ref[2, :, :] += lobj

    if nc > 1:
        cls_l = d_ref[5:5 + nc]                            # (C, 8, 128)
        tcls = d_ref[no + 6:no + 6 + nc]
        cls_sum = jnp.sum(_bce_with_logits(cls_l, tcls), axis=0)
        out_ref[1, :, :] += jnp.where(valid, wcls * cls_sum, 0.0)


def _obj_kernel(x_ref, out_ref, *, no, weight, tile_rows):
    """Weighted sum of BCE(x,0) over the obj channel of one flattened head map.

    x_ref is a (tile_rows, 128) lane-dense view of the raw (B,A,H,W,NO) map;
    the obj channel is selected in-kernel with (flat mod NO == 4) so no strided
    extract / intermediate slab is ever materialized.  Accumulates into a
    resident (1,128) output block.
    """
    t = pl.program_id(0)

    @pl.when(t == 0)
    def _():
        out_ref[...] = jnp.zeros_like(out_ref)

    x = x_ref[...]
    row = lax.broadcasted_iota(jnp.int32, (tile_rows, 128), 0)
    col = lax.broadcasted_iota(jnp.int32, (tile_rows, 128), 1)
    # Tile base is a multiple of NO by construction, so only the within-tile
    # index matters.  m < tile_rows*128 <= 2^19, exact in f32, so the floor
    # trick gives the exact channel index (no integer div/rem needed).
    m = (row * 128 + col).astype(jnp.float32)
    rem = m - float(no) * jnp.floor(m * (1.0 / float(no)))
    is_obj = rem == 4.0

    bce = _bce_zero_target(x)
    contrib = jnp.where(is_obj, bce, 0.0)
    out_ref[...] += weight * jnp.sum(contrib, axis=0, keepdims=True)


# ------------------------------ kernel wrappers -------------------------------

def _matched_losses(data, no, nc, gr):
    nr, r_total, _ = data.shape
    out = pl.pallas_call(
        functools.partial(_matched_kernel, no=no, nc=nc, gr=gr),
        out_shape=jax.ShapeDtypeStruct((3, 8, 128), jnp.float32),
        grid_spec=pltpu.PrefetchScalarGridSpec(
            num_scalar_prefetch=0,
            grid=(r_total // 8,),
            in_specs=[pl.BlockSpec((nr, 8, 128), lambda r: (0, r, 0))],
            out_specs=pl.BlockSpec((3, 8, 128), lambda r: (0, 0, 0))),
        compiler_params=pltpu.CompilerParams(dimension_semantics=("arbitrary",)),
    )(data)
    return jnp.sum(out[0]), jnp.sum(out[1]), jnp.sum(out[2])


def _obj_layer_sum(pi, no, weight, max_tile_rows=2048):
    """Sum of BCE(obj_logit, 0) * weight over one head layer, reading the raw
    NO-channel map exactly once inside the kernel."""
    flat = pi.reshape(-1)                    # free reshape of a contiguous map
    length = flat.shape[0]
    rows = _cdiv(length, 128)
    if rows <= max_tile_rows:
        tile_rows, n_tiles = rows, 1         # single full-array block
    else:
        # tile_rows multiple of 8 (block constraint) and of NO/gcd(NO,128)
        # (so every tile base is a multiple of NO -> in-kernel mask is exact).
        period = no // math.gcd(no, 128)
        unit = (8 * period) // math.gcd(8, period)
        tile_rows = max(unit, (max_tile_rows // unit) * unit)
        n_tiles = _cdiv(rows, tile_rows)
        rows = n_tiles * tile_rows
    lpad = rows * 128
    if lpad != length:
        flat = jnp.pad(flat, (0, lpad - length), constant_values=_PAD_NEG)
    x2d = flat.reshape(rows, 128)

    out = pl.pallas_call(
        functools.partial(_obj_kernel, no=no, weight=float(weight),
                          tile_rows=tile_rows),
        out_shape=jax.ShapeDtypeStruct((1, 128), jnp.float32),
        grid_spec=pltpu.PrefetchScalarGridSpec(
            num_scalar_prefetch=0,
            grid=(n_tiles,),
            in_specs=[pl.BlockSpec((tile_rows, 128), lambda t: (t, 0))],
            out_specs=pl.BlockSpec((1, 128), lambda t: (0, 0))),
        compiler_params=pltpu.CompilerParams(dimension_semantics=("arbitrary",)),
    )(x2d)
    return jnp.sum(out)


# --------------------------- SetCriterion.compute_loss ------------------------

def smooth_bce(eps=0.1):
    return 1.0 - 0.5 * eps, 0.5 * eps


def set_criterion_loss(head_outputs, matched, anchors_grid,
                       box_w=0.05, cls_w=0.5, obj_w=1.0, gr=1.0):
    """Pallas-backed equivalent of SetCriterion.compute_loss (fl_gamma=0,
    cls_pw=obj_pw=1).  `matched` holds precomputed matches per layer.

    NOTE: the objectness target is applied via BCE(x,t)-BCE(x,0) = -x*t, which
    matches the PyTorch scatter tobj[b,a,gj,gi]=t when matched indices are
    unique (true for the synthetic matches used here).
    """
    num_output = len(head_outputs)
    balance = [4.0, 1.0, 0.4] if num_output == 3 else [4.0, 1.0, 0.4, 0.1]
    cp, cn = smooth_bce(eps=0.0)
    num_classes = head_outputs[0].shape[-1] - 5
    no = 5 + num_classes
    nr = no + 9 + num_classes               # ps + tbox + anc + tcls + weights

    # ---- matched-prediction path (single fused kernel over all layers) ----
    ps_l, tbox_l, anc_l, tcls_l, w_l = [], [], [], [], []
    for i, pi in enumerate(head_outputs):
        B, A, H, W, _ = pi.shape
        b, a, gj, gi = matched[i]["indices"]
        n_i = int(b.shape[0])
        count_i = B * A * H * W
        # TODO(synk): the data-dependent gather pi[b, a, gj, gi] stays in XLA glue.
        ps_l.append(pi[b, a, gj, gi])                        # (N_i, 5+C)
        tbox_l.append(matched[i]["tbox"])
        anc_l.append(anchors_grid[i][a])
        tcls_l.append(cn + (cp - cn) * jax.nn.one_hot(
            matched[i]["labels"], num_classes, dtype=jnp.float32))
        w_l.append(jnp.stack(
            [jnp.full((n_i,), 1.0 / n_i, jnp.float32),
             jnp.full((n_i,), 1.0 / (n_i * max(num_classes, 1)), jnp.float32),
             jnp.full((n_i,), balance[i] / count_i, jnp.float32)], axis=1))

    X = jnp.concatenate(
        [jnp.concatenate(ps_l, 0), jnp.concatenate(tbox_l, 0),
         jnp.concatenate(anc_l, 0), jnp.concatenate(tcls_l, 0),
         jnp.concatenate(w_l, 0)], axis=1)                   # (N_total, nr)

    n_total = X.shape[0]
    npad = max(1024, _round_up(n_total, 1024))   # bucketed -> recompile-stable
    pad = npad - n_total
    # padded lanes: prediction box (1x1 @ center) vs target box (2x2 @ center)
    # keeps every CIoU denominator well away from 0; weights stay 0 there.
    pad_row = np.zeros((nr,), np.float32)
    pad_row[no:no + 2] = 0.5       # target xy
    pad_row[no + 2:no + 4] = 2.0   # target wh
    pad_row[no + 4:no + 6] = 1.0   # anchor wh
    Xp = jnp.concatenate(
        [X, jnp.broadcast_to(jnp.asarray(pad_row), (pad, nr))], axis=0)
    R = npad // 128
    data = Xp.T.reshape(nr, R, 128)                          # one fused DMA

    lbox, lcls, lobj_corr = _matched_losses(data, no, num_classes, gr)
    if num_classes <= 1:
        lcls = jnp.zeros((), jnp.float32)

    # ---- objectness path: per-layer kernel over the raw flattened map ----
    lobj = lobj_corr
    for i, pi in enumerate(head_outputs):
        count_i = int(np.prod(pi.shape[:4]))
        lobj = lobj + _obj_layer_sum(pi, no, balance[i] / count_i)

    out_scaling = 3.0 / num_output
    lbox = lbox * box_w * out_scaling
    lobj = lobj * obj_w * out_scaling * (1.4 if num_output == 4 else 1.0)
    lcls = lcls * cls_w * out_scaling
    return {"cls_logits": lcls.reshape(1),
            "bbox_regression": lbox.reshape(1),
            "objectness": lobj.reshape(1)}


# ------------------------------ pure-JAX reference ----------------------------

def _ciou_ref(pbox, tbox):
    eps = 1e-9
    px, py, pw, ph = [pbox[:, k] for k in range(4)]
    tx, ty, tw, th = [tbox[:, k] for k in range(4)]
    b1x1, b1x2 = px - pw / 2, px + pw / 2
    b1y1, b1y2 = py - ph / 2, py + ph / 2
    b2x1, b2x2 = tx - tw / 2, tx + tw / 2
    b2y1, b2y2 = ty - th / 2, ty + th / 2
    inter = (jnp.maximum(jnp.minimum(b1x2, b2x2) - jnp.maximum(b1x1, b2x1), 0.0)
             * jnp.maximum(jnp.minimum(b1y2, b2y2) - jnp.maximum(b1y1, b2y1), 0.0))
    w1, h1 = b1x2 - b1x1, b1y2 - b1y1 + eps
    w2, h2 = b2x2 - b2x1, b2y2 - b2y1 + eps
    union = w1 * h1 + w2 * h2 - inter + eps
    iou = inter / union
    cw = jnp.maximum(b1x2, b2x2) - jnp.minimum(b1x1, b2x1)
    ch = jnp.maximum(b1y2, b2y2) - jnp.minimum(b1y1, b2y1)
    c2 = cw * cw + ch * ch + eps
    rho2 = ((b2x1 + b2x2 - b1x1 - b1x2) ** 2
            + (b2y1 + b2y2 - b1y1 - b1y2) ** 2) / 4.0
    v = (4.0 / (jnp.pi ** 2)) * (jnp.arctan(w2 / h2) - jnp.arctan(w1 / h1)) ** 2
    alpha = v / (v - iou + (1.0 + eps))
    return iou - (rho2 / c2 + v * alpha)


def reference_loss(head_outputs, matched, anchors_grid,
                   box_w=0.05, cls_w=0.5, obj_w=1.0, gr=1.0):
    num_output = len(head_outputs)
    balance = [4.0, 1.0, 0.4] if num_output == 3 else [4.0, 1.0, 0.4, 0.1]
    cp, cn = smooth_bce(eps=0.0)
    num_classes = head_outputs[0].shape[-1] - 5
    lbox = lobj = lcls = 0.0
    for i, pi in enumerate(head_outputs):
        B, A, H, W, _ = pi.shape
        b, a, gj, gi = matched[i]["indices"]
        tbox, labels = matched[i]["tbox"], matched[i]["labels"]
        ps = pi[b, a, gj, gi]
        sig = jax.nn.sigmoid(ps[:, 0:4])
        pxy = sig[:, 0:2] * 2.0 - 0.5
        pwh = (sig[:, 2:4] * 2.0) ** 2 * anchors_grid[i][a]
        pbox = jnp.concatenate([pxy, pwh], axis=1)
        iou = _ciou_ref(pbox, tbox)
        lbox = lbox + jnp.mean(1.0 - iou)
        if num_classes > 1:
            t = cn + (cp - cn) * jax.nn.one_hot(labels, num_classes,
                                                dtype=jnp.float32)
            lcls = lcls + jnp.mean(_bce_with_logits(ps[:, 5:], t))
        tobj = jnp.zeros((B, A, H, W), jnp.float32).at[b, a, gj, gi].set(
            (1.0 - gr) + gr * jnp.maximum(iou, 0.0))
        lobj = lobj + jnp.mean(_bce_with_logits(pi[..., 4], tobj)) * balance[i]
    out_scaling = 3.0 / num_output
    return {"cls_logits": jnp.reshape(lcls * cls_w * out_scaling, (1,)),
            "bbox_regression": jnp.reshape(lbox * box_w * out_scaling, (1,)),
            "objectness": jnp.reshape(
                lobj * obj_w * out_scaling * (1.4 if num_output == 4 else 1.0),
                (1,))}


# ----------------------------------- main --------------------------------------

if __name__ == "__main__":
    key = jax.random.PRNGKey(0)
    B, A, C = 2, 3, 4          # batch, anchors/layer, classes
    NO = 5 + C                  # box(4) + obj(1) + classes
    SPATIAL = [16, 8, 4]        # grid sizes of the 3 detection layers
    N_MATCH = 16                # matched targets per layer (synthetic)

    anchors_grid = [
        jnp.array([[1.25, 1.625], [2.0, 3.75], [4.125, 2.875]], jnp.float32),
        jnp.array([[1.875, 3.8125], [3.875, 2.8125], [3.6875, 7.4375]], jnp.float32),
        jnp.array([[3.625, 2.8125], [4.875, 6.1875], [11.65625, 10.1875]], jnp.float32),
    ]

    head_outputs, matched = [], []
    for li, hw in enumerate(SPATIAL):
        key, k1, k2, k3, k4, k5 = jax.random.split(key, 6)
        pi = jax.random.normal(k1, (B, A, hw, hw, NO), jnp.float32)
        head_outputs.append(pi)

        flat = jax.random.permutation(k2, B * A * hw * hw)[:N_MATCH]
        gi = flat % hw
        rem = flat // hw
        gj = rem % hw
        rem = rem // hw
        a = rem % A
        b = rem // A
        tbox = jnp.concatenate(
            [jax.random.uniform(k3, (N_MATCH, 2), jnp.float32, 0.0, 1.0),
             jax.random.uniform(k4, (N_MATCH, 2), jnp.float32, 0.5, 4.0)], axis=1)
        labels = jax.random.randint(k5, (N_MATCH,), 0, C, dtype=jnp.int32)
        matched.append({"indices": (b.astype(jnp.int32), a.astype(jnp.int32),
                                    gj.astype(jnp.int32), gi.astype(jnp.int32)),
                        "tbox": tbox, "labels": labels})

    losses = set_criterion_loss(head_outputs, matched, anchors_grid)
    losses = jax.block_until_ready(losses)

    ref = jax.block_until_ready(reference_loss(head_outputs, matched, anchors_grid))
    for name in ("cls_logits", "bbox_regression", "objectness"):
        np.testing.assert_allclose(np.asarray(losses[name]), np.asarray(ref[name]),
                                   rtol=2e-3, atol=2e-4)

    print("KERNEL_OK")
</pallas_src>

<mosaic_0001>
module attributes {stable_mosaic.version = 11 : i64} {
  func.func @_matched_kernel(%arg0: i32, %arg1: memref<22x8x128xf32, #tpu.memory_space<vmem>>, %arg2: memref<3x8x128xf32, #tpu.memory_space<vmem>>) attributes {dimension_semantics = [#tpu.dimension_semantics<arbitrary>], iteration_bounds = array<i64: 1>, scalar_prefetch = 0 : i64, scratch_operands = 0 : i64, tpu.core_type = #tpu.core_type<tc>, window_params = [{transform_indices = @transform_0, window_bounds = array<i64: 22, 8, 128>}, {pipeline_mode = #tpu.pipeline_mode<synchronous>, transform_indices = @transform_1, window_bounds = array<i64: 3, 8, 128>}]} {
    %c0_i32 = arith.constant 0 : i32
    %0 = arith.cmpi eq, %arg0, %c0_i32 : i32
    %1 = arith.extui %0 : i1 to i32
    %c0_i32_0 = arith.constant 0 : i32
    %2 = arith.cmpi ne, %1, %c0_i32_0 : i32
    scf.if %2 {
      %cst_89 = arith.constant 0.000000e+00 : f32
      %255 = vector.broadcast %cst_89 : f32 to vector<3x8x128xf32>
      %c0_90 = arith.constant 0 : index
      %c0_91 = arith.constant 0 : index
      %c0_92 = arith.constant 0 : index
      %256 = vector.load %arg2[%c0_90, %c0_91, %c0_92] : memref<3x8x128xf32, #tpu.memory_space<vmem>>, vector<3x8x128xf32>
      tpu.vector_store %arg2[%c0_90, %c0_91, %c0_92], %255 {strides = array<i32>} : memref<3x8x128xf32, #tpu.memory_space<vmem>>, vector<3x8x128xf32>,
    } else {
    }
    %c0 = arith.constant 0 : index
    %c0_1 = arith.constant 0 : index
    %c0_2 = arith.constant 0 : index
    %3 = vector.load %arg1[%c0, %c0_1, %c0_2] : memref<22x8x128xf32, #tpu.memory_space<vmem>>, vector<2x8x128xf32>
    %c2 = arith.constant 2 : index
    %c0_3 = arith.constant 0 : index
    %c0_4 = arith.constant 0 : index
    %4 = vector.load %arg1[%c2, %c0_3, %c0_4] : memref<22x8x128xf32, #tpu.memory_space<vmem>>, vector<2x8x128xf32>
    %c4 = arith.constant 4 : index
    %c0_5 = arith.constant 0 : index
    %c0_6 = arith.constant 0 : index
    %5 = vector.load %arg1[%c4, %c0_5, %c0_6] : memref<22x8x128xf32, #tpu.memory_space<vmem>>, vector<1x8x128xf32>
    %6 = vector.shape_cast %5 : vector<1x8x128xf32> to vector<8x128xf32>
    %c9 = arith.constant 9 : index
    %c0_7 = arith.constant 0 : index
    %c0_8 = arith.constant 0 : index
    %7 = vector.load %arg1[%c9, %c0_7, %c0_8] : memref<22x8x128xf32, #tpu.memory_space<vmem>>, vector<2x8x128xf32>
    %c11 = arith.constant 11 : index
    %c0_9 = arith.constant 0 : index
    %c0_10 = arith.constant 0 : index
    %8 = vector.load %arg1[%c11, %c0_9, %c0_10] : memref<22x8x128xf32, #tpu.memory_space<vmem>>, vector<2x8x128xf32>
    %c13 = arith.constant 13 : index
    %c0_11 = arith.constant 0 : index
    %c0_12 = arith.constant 0 : index
    %9 = vector.load %arg1[%c13, %c0_11, %c0_12] : memref<22x8x128xf32, #tpu.memory_space<vmem>>, vector<2x8x128xf32>
    %c19 = arith.constant 19 : index
    %c0_13 = arith.constant 0 : index
    %c0_14 = arith.constant 0 : index
    %10 = vector.load %arg1[%c19, %c0_13, %c0_14] : memref<22x8x128xf32, #tpu.memory_space<vmem>>, vector<1x8x128xf32>
    %11 = vector.shape_cast %10 : vector<1x8x128xf32> to vector<8x128xf32>
    %c20 = arith.constant 20 : index
    %c0_15 = arith.constant 0 : index
    %c0_16 = arith.constant 0 : index
    %12 = vector.load %arg1[%c20, %c0_15, %c0_16] : memref<22x8x128xf32, #tpu.memory_space<vmem>>, vector<1x8x128xf32>
    %13 = vector.shape_cast %12 : vector<1x8x128xf32> to vector<8x128xf32>
    %c21 = arith.constant 21 : index
    %c0_17 = arith.constant 0 : index
    %c0_18 = arith.constant 0 : index
    %14 = vector.load %arg1[%c21, %c0_17, %c0_18] : memref<22x8x128xf32, #tpu.memory_space<vmem>>, vector<1x8x128xf32>
    %15 = vector.shape_cast %14 : vector<1x8x128xf32> to vector<8x128xf32>
    %16 = arith.negf %3 : vector<2x8x128xf32>
    %17 = math.exp %16 : vector<2x8x128xf32>
    %cst = arith.constant 1.000000e+00 : f32
    %18 = vector.broadcast %cst : f32 to vector<2x8x128xf32>
    %19 = arith.addf %18, %17 : vector<2x8x128xf32>
    %20 = arith.divf %18, %19 : vector<2x8x128xf32>
    %cst_19 = arith.constant 2.000000e+00 : f32
    %21 = vector.broadcast %cst_19 : f32 to vector<2x8x128xf32>
    %22 = arith.mulf %20, %21 : vector<2x8x128xf32>
    %cst_20 = arith.constant 5.000000e-01 : f32
    %23 = vector.broadcast %cst_20 : f32 to vector<2x8x128xf32>
    %24 = arith.subf %22, %23 : vector<2x8x128xf32>
    %25 = arith.negf %4 : vector<2x8x128xf32>
    %26 = math.exp %25 : vector<2x8x128xf32>
    %cst_21 = arith.constant 1.000000e+00 : f32
    %27 = vector.broadcast %cst_21 : f32 to vector<2x8x128xf32>
    %28 = arith.addf %27, %26 : vector<2x8x128xf32>
    %29 = arith.divf %27, %28 : vector<2x8x128xf32>
    %cst_22 = arith.constant 2.000000e+00 : f32
    %30 = vector.broadcast %cst_22 : f32 to vector<2x8x128xf32>
    %31 = arith.mulf %29, %30 : vector<2x8x128xf32>
    %32 = arith.mulf %31, %31 : vector<2x8x128xf32>
    %33 = arith.mulf %32, %9 : vector<2x8x128xf32>
    %cst_23 = arith.constant 5.000000e-01 : f32
    %34 = vector.broadcast %cst_23 : f32 to vector<2x8x128xf32>
    %35 = arith.mulf %33, %34 : vector<2x8x128xf32>
    %36 = arith.subf %24, %35 : vector<2x8x128xf32>
    %cst_24 = arith.constant 5.000000e-01 : f32
    %37 = vector.broadcast %cst_24 : f32 to vector<2x8x128xf32>
    %38 = arith.mulf %33, %37 : vector<2x8x128xf32>
    %39 = arith.addf %24, %38 : vector<2x8x128xf32>
    %cst_25 = arith.constant 5.000000e-01 : f32
    %40 = vector.broadcast %cst_25 : f32 to vector<2x8x128xf32>
    %41 = arith.mulf %8, %40 : vector<2x8x128xf32>
    %42 = arith.subf %7, %41 : vector<2x8x128xf32>
    %cst_26 = arith.constant 5.000000e-01 : f32
    %43 = vector.broadcast %cst_26 : f32 to vector<2x8x128xf32>
    %44 = arith.mulf %8, %43 : vector<2x8x128xf32>
    %45 = arith.addf %7, %44 : vector<2x8x128xf32>
    %46 = arith.minimumf %39, %45 : vector<2x8x128xf32>
    %47 = arith.maximumf %36, %42 : vector<2x8x128xf32>
    %48 = arith.subf %46, %47 : vector<2x8x128xf32>
    %cst_27 = arith.constant 0.000000e+00 : f32
    %49 = vector.broadcast %cst_27 : f32 to vector<2x8x128xf32>
    %50 = arith.maximumf %48, %49 : vector<2x8x128xf32>
    %51 = vector.extract_strided_slice %50 {offsets = [0, 0, 0], sizes = [1, 8, 128], strides = [1, 1, 1]} : vector<2x8x128xf32> to vector<1x8x128xf32>
    %52 = vector.shape_cast %51 : vector<1x8x128xf32> to vector<8x128xf32>
    %53 = vector.extract_strided_slice %50 {offsets = [1, 0, 0], sizes = [1, 8, 128], strides = [1, 1, 1]} : vector<2x8x128xf32> to vector<1x8x128xf32>
    %54 = vector.shape_cast %53 : vector<1x8x128xf32> to vector<8x128xf32>
    %55 = arith.mulf %52, %54 : vector<8x128xf32>
    %56 = vector.extract_strided_slice %33 {offsets = [0, 0, 0], sizes = [1, 8, 128], strides = [1, 1, 1]} : vector<2x8x128xf32> to vector<1x8x128xf32>
    %57 = vector.shape_cast %56 : vector<1x8x128xf32> to vector<8x128xf32>
    %58 = vector.extract_strided_slice %33 {offsets = [1, 0, 0], sizes = [1, 8, 128], strides = [1, 1, 1]} : vector<2x8x128xf32> to vector<1x8x128xf32>
    %59 = vector.shape_cast %58 : vector<1x8x128xf32> to vector<8x128xf32>
    %cst_28 = arith.constant 9.99999971E-10 : f32
    %60 = vector.broadcast %cst_28 : f32 to vector<8x128xf32>
    %61 = arith.addf %59, %60 : vector<8x128xf32>
    %62 = vector.extract_strided_slice %8 {offsets = [0, 0, 0], sizes = [1, 8, 128], strides = [1, 1, 1]} : vector<2x8x128xf32> to vector<1x8x128xf32>
    %63 = vector.shape_cast %62 : vector<1x8x128xf32> to vector<8x128xf32>
    %64 = vector.extract_strided_slice %8 {offsets = [1, 0, 0], sizes = [1, 8, 128], strides = [1, 1, 1]} : vector<2x8x128xf32> to vector<1x8x128xf32>
    %65 = vector.shape_cast %64 : vector<1x8x128xf32> to vector<8x128xf32>
    %cst_29 = arith.constant 9.99999971E-10 : f32
    %66 = vector.broadcast %cst_29 : f32 to vector<8x128xf32>
    %67 = arith.addf %65, %66 : vector<8x128xf32>
    %68 = arith.mulf %57, %61 : vector<8x128xf32>
    %69 = arith.mulf %63, %67 : vector<8x128xf32>
    %70 = arith.addf %68, %69 : vector<8x128xf32>
    %71 = arith.subf %70, %55 : vector<8x128xf32>
    %cst_30 = arith.constant 9.99999971E-10 : f32
    %72 = vector.broadcast %cst_30 : f32 to vector<8x128xf32>
    %73 = arith.addf %71, %72 : vector<8x128xf32>
    %74 = tpu.reciprocal %73 {approx = true} : vector<8x128xf32> -> vector<8x128xf32>
    %75 = arith.mulf %73, %74 : vector<8x128xf32>
    %cst_31 = arith.constant 2.000000e+00 : f32
    %76 = vector.broadcast %cst_31 : f32 to vector<8x128xf32>
    %77 = arith.subf %76, %75 : vector<8x128xf32>
    %78 = arith.mulf %74, %77 : vector<8x128xf32>
    %79 = arith.mulf %55, %78 : vector<8x128xf32>
    %80 = arith.maximumf %39, %45 : vector<2x8x128xf32>
    %81 = arith.minimumf %36, %42 : vector<2x8x128xf32>
    %82 = arith.subf %80, %81 : vector<2x8x128xf32>
    %83 = vector.extract_strided_slice %82 {offsets = [0, 0, 0], sizes = [1, 8, 128], strides = [1, 1, 1]} : vector<2x8x128xf32> to vector<1x8x128xf32>
    %84 = vector.shape_cast %83 : vector<1x8x128xf32> to vector<8x128xf32>
    %85 = vector.extract_strided_slice %82 {offsets = [0, 0, 0], sizes = [1, 8, 128], strides = [1, 1, 1]} : vector<2x8x128xf32> to vector<1x8x128xf32>
    %86 = vector.shape_cast %85 : vector<1x8x128xf32> to vector<8x128xf32>
    %87 = arith.mulf %84, %86 : vector<8x128xf32>
    %88 = vector.extract_strided_slice %82 {offsets = [1, 0, 0], sizes = [1, 8, 128], strides = [1, 1, 1]} : vector<2x8x128xf32> to vector<1x8x128xf32>
    %89 = vector.shape_cast %88 : vector<1x8x128xf32> to vector<8x128xf32>
    %90 = vector.extract_strided_slice %82 {offsets = [1, 0, 0], sizes = [1, 8, 128], strides = [1, 1, 1]} : vector<2x8x128xf32> to vector<1x8x128xf32>
    %91 = vector.shape_cast %90 : vector<1x8x128xf32> to vector<8x128xf32>
    %92 = arith.mulf %89, %91 : vector<8x128xf32>
    %93 = arith.addf %87, %92 : vector<8x128xf32>
    %cst_32 = arith.constant 9.99999971E-10 : f32
    %94 = vector.broadcast %cst_32 : f32 to vector<8x128xf32>
    %95 = arith.addf %93, %94 : vector<8x128xf32>
    %96 = arith.addf %42, %45 : vector<2x8x128xf32>
    %97 = arith.addf %36, %39 : vector<2x8x128xf32>
    %98 = arith.subf %96, %97 : vector<2x8x128xf32>
    %99 = vector.extract_strided_slice %98 {offsets = [0, 0, 0], sizes = [1, 8, 128], strides = [1, 1, 1]} : vector<2x8x128xf32> to vector<1x8x128xf32>
    %100 = vector.shape_cast %99 : vector<1x8x128xf32> to vector<8x128xf32>
    %101 = vector.extract_strided_slice %98 {offsets = [0, 0, 0], sizes = [1, 8, 128], strides = [1, 1, 1]} : vector<2x8x128xf32> to vector<1x8x128xf32>
    %102 = vector.shape_cast %101 : vector<1x8x128xf32> to vector<8x128xf32>
    %103 = arith.mulf %100, %102 : vector<8x128xf32>
    %104 = vector.extract_strided_slice %98 {offsets = [1, 0, 0], sizes = [1, 8, 128], strides = [1, 1, 1]} : vector<2x8x128xf32> to vector<1x8x128xf32>
    %105 = vector.shape_cast %104 : vector<1x8x128xf32> to vector<8x128xf32>
    %106 = vector.extract_strided_slice %98 {offsets = [1, 0, 0], sizes = [1, 8, 128], strides = [1, 1, 1]} : vector<2x8x128xf32> to vector<1x8x128xf32>
    %107 = vector.shape_cast %106 : vector<1x8x128xf32> to vector<8x128xf32>
    %108 = arith.mulf %105, %107 : vector<8x128xf32>
    %109 = arith.addf %103, %108 : vector<8x128xf32>
    %cst_33 = arith.constant 2.500000e-01 : f32
    %110 = vector.broadcast %cst_33 : f32 to vector<8x128xf32>
    %111 = arith.mulf %109, %110 : vector<8x128xf32>
    %112 = arith.mulf %63, %61 : vector<8x128xf32>
    %113 = arith.mulf %57, %67 : vector<8x128xf32>
    %114 = arith.subf %112, %113 : vector<8x128xf32>
    %115 = math.absf %114 : vector<8x128xf32>
    %116 = arith.mulf %61, %67 : vector<8x128xf32>
    %117 = arith.mulf %57, %63 : vector<8x128xf32>
    %118 = arith.addf %116, %117 : vector<8x128xf32>
    %119 = tpu.reciprocal %118 {approx = true} : vector<8x128xf32> -> vector<8x128xf32>
    %120 = arith.mulf %118, %119 : vector<8x128xf32>
    %cst_34 = arith.constant 2.000000e+00 : f32
    %121 = vector.broadcast %cst_34 : f32 to vector<8x128xf32>
    %122 = arith.subf %121, %120 : vector<8x128xf32>
    %123 = arith.mulf %119, %122 : vector<8x128xf32>
    %124 = arith.mulf %115, %123 : vector<8x128xf32>
    %cst_35 = arith.constant 1.000000e+00 : f32
    %125 = vector.broadcast %cst_35 : f32 to vector<8x128xf32>
    %126 = arith.cmpf ogt, %124, %125 : vector<8x128xf32>
    %cst_36 = arith.constant 1.000000e-30 : f32
    %127 = vector.broadcast %cst_36 : f32 to vector<8x128xf32>
    %128 = arith.maximumf %124, %127 : vector<8x128xf32>
    %129 = tpu.reciprocal %128 {approx = true} : vector<8x128xf32> -> vector<8x128xf32>
    %130 = arith.mulf %128, %129 : vector<8x128xf32>
    %cst_37 = arith.constant 2.000000e+00 : f32
    %131 = vector.broadcast %cst_37 : f32 to vector<8x128xf32>
    %132 = arith.subf %131, %130 : vector<8x128xf32>
    %133 = arith.mulf %129, %132 : vector<8x128xf32>
    %134 = arith.select %126, %133, %124 : vector<8x128xi1>, vector<8x128xf32>
    %135 = arith.mulf %134, %134 : vector<8x128xf32>
    %cst_38 = arith.constant 1.000000e+00 : f32
    %136 = vector.broadcast %cst_38 : f32 to vector<8x128xf32>
    %137 = arith.addf %136, %135 : vector<8x128xf32>
    %138 = math.sqrt %137 : vector<8x128xf32>
    %cst_39 = arith.constant 1.000000e+00 : f32
    %139 = vector.broadcast %cst_39 : f32 to vector<8x128xf32>
    %140 = arith.addf %139, %138 : vector<8x128xf32>
    %141 = tpu.reciprocal %140 {approx = true} : vector<8x128xf32> -> vector<8x128xf32>
    %142 = arith.mulf %140, %141 : vector<8x128xf32>
    %cst_40 = arith.constant 2.000000e+00 : f32
    %143 = vector.broadcast %cst_40 : f32 to vector<8x128xf32>
    %144 = arith.subf %143, %142 : vector<8x128xf32>
    %145 = arith.mulf %141, %144 : vector<8x128xf32>
    %146 = arith.mulf %134, %145 : vector<8x128xf32>
    %147 = arith.mulf %146, %146 : vector<8x128xf32>
    %cst_41 = arith.constant 1.000000e+00 : f32
    %148 = vector.broadcast %cst_41 : f32 to vector<8x128xf32>
    %149 = arith.addf %148, %147 : vector<8x128xf32>
    %150 = math.sqrt %149 : vector<8x128xf32>
    %cst_42 = arith.constant 1.000000e+00 : f32
    %151 = vector.broadcast %cst_42 : f32 to vector<8x128xf32>
    %152 = arith.addf %151, %150 : vector<8x128xf32>
    %153 = tpu.reciprocal %152 {approx = true} : vector<8x128xf32> -> vector<8x128xf32>
    %154 = arith.mulf %152, %153 : vector<8x128xf32>
    %cst_43 = arith.constant 2.000000e+00 : f32
    %155 = vector.broadcast %cst_43 : f32 to vector<8x128xf32>
    %156 = arith.subf %155, %154 : vector<8x128xf32>
    %157 = arith.mulf %153, %156 : vector<8x128xf32>
    %158 = arith.mulf %146, %157 : vector<8x128xf32>
    %159 = arith.mulf %158, %158 : vector<8x128xf32>
    %cst_44 = arith.constant 9.000000e+00 : f32
    %160 = vector.broadcast %cst_44 : f32 to vector<8x128xf32>
    %161 = arith.divf %159, %160 : vector<8x128xf32>
    %cst_45 = arith.constant -0.142857149 : f32
    %162 = vector.broadcast %cst_45 : f32 to vector<8x128xf32>
    %163 = arith.addf %162, %161 : vector<8x128xf32>
    %164 = arith.mulf %159, %163 : vector<8x128xf32>
    %cst_46 = arith.constant 2.000000e-01 : f32
    %165 = vector.broadcast %cst_46 : f32 to vector<8x128xf32>
    %166 = arith.addf %165, %164 : vector<8x128xf32>
    %167 = arith.mulf %159, %166 : vector<8x128xf32>
    %cst_47 = arith.constant -0.333333343 : f32
    %168 = vector.broadcast %cst_47 : f32 to vector<8x128xf32>
    %169 = arith.addf %168, %167 : vector<8x128xf32>
    %170 = arith.mulf %159, %169 : vector<8x128xf32>
    %cst_48 = arith.constant 1.000000e+00 : f32
    %171 = vector.broadcast %cst_48 : f32 to vector<8x128xf32>
    %172 = arith.addf %171, %170 : vector<8x128xf32>
    %173 = arith.mulf %158, %172 : vector<8x128xf32>
    %cst_49 = arith.constant 4.000000e+00 : f32
    %174 = vector.broadcast %cst_49 : f32 to vector<8x128xf32>
    %175 = arith.mulf %174, %173 : vector<8x128xf32>
    %cst_50 = arith.constant 1.57079637 : f32
    %176 = vector.broadcast %cst_50 : f32 to vector<8x128xf32>
    %177 = arith.subf %176, %175 : vector<8x128xf32>
    %178 = arith.select %126, %177, %175 : vector<8x128xi1>, vector<8x128xf32>
    %cst_51 = arith.constant 0.405284733 : f32
    %179 = vector.broadcast %cst_51 : f32 to vector<8x128xf32>
    %180 = arith.mulf %179, %178 : vector<8x128xf32>
    %181 = arith.mulf %180, %178 : vector<8x128xf32>
    %182 = arith.subf %181, %79 : vector<8x128xf32>
    %cst_52 = arith.constant 1.000000e+00 : f32
    %183 = vector.broadcast %cst_52 : f32 to vector<8x128xf32>
    %184 = arith.addf %182, %183 : vector<8x128xf32>
    %185 = tpu.reciprocal %184 {approx = true} : vector<8x128xf32> -> vector<8x128xf32>
    %186 = arith.mulf %184, %185 : vector<8x128xf32>
    %cst_53 = arith.constant 2.000000e+00 : f32
    %187 = vector.broadcast %cst_53 : f32 to vector<8x128xf32>
    %188 = arith.subf %187, %186 : vector<8x128xf32>
    %189 = arith.mulf %185, %188 : vector<8x128xf32>
    %190 = arith.mulf %181, %189 : vector<8x128xf32>
    %191 = tpu.reciprocal %95 {approx = true} : vector<8x128xf32> -> vector<8x128xf32>
    %192 = arith.mulf %95, %191 : vector<8x128xf32>
    %cst_54 = arith.constant 2.000000e+00 : f32
    %193 = vector.broadcast %cst_54 : f32 to vector<8x128xf32>
    %194 = arith.subf %193, %192 : vector<8x128xf32>
    %195 = arith.mulf %191, %194 : vector<8x128xf32>
    %196 = arith.mulf %111, %195 : vector<8x128xf32>
    %197 = arith.mulf %181, %190 : vector<8x128xf32>
    %198 = arith.addf %196, %197 : vector<8x128xf32>
    %199 = arith.subf %79, %198 : vector<8x128xf32>
    %cst_55 = arith.constant 0.000000e+00 : f32
    %200 = vector.broadcast %cst_55 : f32 to vector<8x128xf32>
    %201 = arith.cmpf ogt, %15, %200 : vector<8x128xf32>
    %cst_56 = arith.constant 1.000000e+00 : f32
    %202 = vector.broadcast %cst_56 : f32 to vector<8x128xf32>
    %203 = arith.subf %202, %199 : vector<8x128xf32>
    %204 = arith.mulf %11, %203 : vector<8x128xf32>
    %cst_57 = arith.constant 0.000000e+00 : f32
    %205 = vector.broadcast %cst_57 : f32 to vector<8x128xf32>
    %206 = arith.select %201, %204, %205 : vector<8x128xi1>, vector<8x128xf32>
    %cst_58 = arith.constant 0.000000e+00 : f32
    %207 = vector.broadcast %cst_58 : f32 to vector<8x128xf32>
    %208 = arith.maximumf %199, %207 : vector<8x128xf32>
    %cst_59 = arith.constant 1.000000e+00 : f32
    %209 = vector.broadcast %cst_59 : f32 to vector<8x128xf32>
    %210 = arith.mulf %209, %208 : vector<8x128xf32>
    %cst_60 = arith.constant 0.000000e+00 : f32
    %211 = vector.broadcast %cst_60 : f32 to vector<8x128xf32>
    %212 = arith.addf %211, %210 : vector<8x128xf32>
    %cst_61 = arith.constant 0.000000e+00 : f32
    %213 = vector.broadcast %cst_61 : f32 to vector<8x128xf32>
    %214 = arith.subf %213, %6 : vector<8x128xf32>
    %215 = arith.mulf %214, %212 : vector<8x128xf32>
    %216 = arith.mulf %15, %215 : vector<8x128xf32>
    %cst_62 = arith.constant 0.000000e+00 : f32
    %217 = vector.broadcast %cst_62 : f32 to vector<8x128xf32>
    %218 = arith.select %201, %216, %217 : vector<8x128xi1>, vector<8x128xf32>
    %c0_63 = arith.constant 0 : index
    %c0_64 = arith.constant 0 : index
    %c0_65 = arith.constant 0 : index
    %219 = vector.load %arg2[%c0_63, %c0_64, %c0_65] : memref<3x8x128xf32, #tpu.memory_space<vmem>>, vector<1x8x128xf32>
    %220 = vector.shape_cast %219 : vector<1x8x128xf32> to vector<8x128xf32>
    %221 = arith.addf %220, %206 : vector<8x128xf32>
    %c0_66 = arith.constant 0 : index
    %c0_67 = arith.constant 0 : index
    %c0_68 = arith.constant 0 : index
    %222 = vector.load %arg2[%c0_66, %c0_67, %c0_68] : memref<3x8x128xf32, #tpu.memory_space<vmem>>, vector<1x8x128xf32>
    %223 = vector.shape_cast %222 : vector<1x8x128xf32> to vector<8x128xf32>
    %224 = vector.shape_cast %221 : vector<8x128xf32> to vector<1x8x128xf32>
    tpu.vector_store %arg2[%c0_66, %c0_67, %c0_68], %224 {strides = array<i32>} : memref<3x8x128xf32, #tpu.memory_space<vmem>>, vector<1x8x128xf32>,
    %c2_69 = arith.constant 2 : index
    %c0_70 = arith.constant 0 : index
    %c0_71 = arith.constant 0 : index
    %225 = vector.load %arg2[%c2_69, %c0_70, %c0_71] : memref<3x8x128xf32, #tpu.memory_space<vmem>>, vector<1x8x128xf32>
    %226 = vector.shape_cast %225 : vector<1x8x128xf32> to vector<8x128xf32>
    %227 = arith.addf %226, %218 : vector<8x128xf32>
    %c2_72 = arith.constant 2 : index
    %c0_73 = arith.constant 0 : index
    %c0_74 = arith.constant 0 : index
    %228 = vector.load %arg2[%c2_72, %c0_73, %c0_74] : memref<3x8x128xf32, #tpu.memory_space<vmem>>, vector<1x8x128xf32>
    %229 = vector.shape_cast %228 : vector<1x8x128xf32> to vector<8x128xf32>
    %230 = vector.shape_cast %227 : vector<8x128xf32> to vector<1x8x128xf32>
    tpu.vector_store %arg2[%c2_72, %c0_73, %c0_74], %230 {strides = array<i32>} : memref<3x8x128xf32, #tpu.memory_space<vmem>>, vector<1x8x128xf32>,
    %c5 = arith.constant 5 : index
    %c0_75 = arith.constant 0 : index
    %c0_76 = arith.constant 0 : index
    %231 = vector.load %arg1[%c5, %c0_75, %c0_76] : memref<22x8x128xf32, #tpu.memory_space<vmem>>, vector<4x8x128xf32>
    %c15 = arith.constant 15 : index
    %c0_77 = arith.constant 0 : index
    %c0_78 = arith.constant 0 : index
    %232 = vector.load %arg1[%c15, %c0_77, %c0_78] : memref<22x8x128xf32, #tpu.memory_space<vmem>>, vector<4x8x128xf32>
    %cst_79 = arith.constant 0.000000e+00 : f32
    %233 = vector.broadcast %cst_79 : f32 to vector<4x8x128xf32>
    %234 = arith.maximumf %231, %233 : vector<4x8x128xf32>
    %235 = arith.mulf %231, %232 : vector<4x8x128xf32>
    %236 = arith.subf %234, %235 : vector<4x8x128xf32>
    %237 = math.absf %231 : vector<4x8x128xf32>
    %cst_80 = arith.constant 0.000000e+00 : f32
    %238 = vector.broadcast %cst_80 : f32 to vector<4x8x128xf32>
    %239 = arith.subf %238, %237 : vector<4x8x128xf32>
    %240 = math.exp %239 : vector<4x8x128xf32>
    %cst_81 = arith.constant 1.000000e+00 : f32
    %241 = vector.broadcast %cst_81 : f32 to vector<4x8x128xf32>
    %242 = arith.addf %241, %240 : vector<4x8x128xf32>
    %243 = math.log %242 : vector<4x8x128xf32>
    %244 = arith.addf %236, %243 : vector<4x8x128xf32>
    %cst_82 = arith.constant dense<0.000000e+00> : vector<8x128xf32>
    %245 = vector.multi_reduction <add>, %244, %cst_82 [0] : vector<4x8x128xf32> to vector<8x128xf32>
    %c1 = arith.constant 1 : index
    %c0_83 = arith.constant 0 : index
    %c0_84 = arith.constant 0 : index
    %246 = vector.load %arg2[%c1, %c0_83, %c0_84] : memref<3x8x128xf32, #tpu.memory_space<vmem>>, vector<1x8x128xf32>
    %247 = vector.shape_cast %246 : vector<1x8x128xf32> to vector<8x128xf32>
    %248 = arith.mulf %13, %245 : vector<8x128xf32>
    %cst_85 = arith.constant 0.000000e+00 : f32
    %249 = vector.broadcast %cst_85 : f32 to vector<8x128xf32>
    %250 = arith.select %201, %248, %249 : vector<8x128xi1>, vector<8x128xf32>
    %251 = arith.addf %247, %250 : vector<8x128xf32>
    %c1_86 = arith.constant 1 : index
    %c0_87 = arith.constant 0 : index
    %c0_88 = arith.constant 0 : index
    %252 = vector.load %arg2[%c1_86, %c0_87, %c0_88] : memref<3x8x128xf32, #tpu.memory_space<vmem>>, vector<1x8x128xf32>
    %253 = vector.shape_cast %252 : vector<1x8x128xf32> to vector<8x128xf32>
    %254 = vector.shape_cast %251 : vector<8x128xf32> to vector<1x8x128xf32>
    tpu.vector_store %arg2[%c1_86, %c0_87, %c0_88], %254 {strides = array<i32>} : memref<3x8x128xf32, #tpu.memory_space<vmem>>, vector<1x8x128xf32>,
    return
  }
  func.func @transform_0(%arg0: i32) -> (i32, i32, i32) {
    %c0_i32 = arith.constant 0 : i32
    %c0_i32_0 = arith.constant 0 : i32
    %c0_i32_1 = arith.constant 0 : i32
    return %c0_i32, %arg0, %c0_i32_0 : i32, i32, i32
  }
  func.func @transform_1(%arg0: i32) -> (i32, i32, i32) {
    %c0_i32 = arith.constant 0 : i32
    %c0_i32_0 = arith.constant 0 : i32
    %c0_i32_1 = arith.constant 0 : i32
    %c0_i32_2 = arith.constant 0 : i32
    return %c0_i32, %c0_i32_0, %c0_i32_1 : i32, i32, i32
  }
}

</mosaic_0001>

<llo_original>
// kernel: tpu_custom_call.1
$region0: #{tpu_custom_call.1}
  #allocation0 [shape = 'u32[]', space=smem, size = 0x4, offset = 0x4, fixed_abs, tag = 'smem constant byte address 0x4 - core index']
  #allocation1 [shape = 'u32[144,128]{1,0:T(1,128)}', space=vmem, size = 0x12000, scoped, tag = 'internal scratch']
  %s0 = inlined_call_operand.hbm [shape: f32[22,8,128], index: 0, kind: input, shape index: {}]
  %s1 = inlined_call_operand.hbm [shape: f32[3,8,128], index: 1, kind: output, shape index: {}]
  %s2 = sld [smem:[#allocation0]]
  $region22: #{tpu_custom_call.1} parent=0
    _
  %s4 = ssub.s32 1, %s2
  %s5 = scalar_select 0, %s4, %s2
  $region1: #{tpu_custom_call.1} parent=0
    #allocation2 [shape = 'u8[90112]{0}', space=vmem, size = 0x16000, scoped, tag = 'input window, operand 0, single buffered']
    #allocation3 [shape = 's32[1]{0}', space=sflag, size = 0x4, scoped, tag = 'scoped memory for tpu_custom_call.1']
    #allocation4 [shape = 's32[1]{0}', space=sflag, size = 0x4, scoped, tag = 'scoped memory for tpu_custom_call.1']
    #allocation5 [shape = 'u8[12288]{0}', space=vmem, size = 0x3000, scoped, tag = 'output window, operand 0, single buffered']
    %6 = vsyncpa [#allocation3], 0
    %7 = vsyncpa [#allocation4], 0
    // Predicated region
    $region2: #{tpu_custom_call.1} parent=1 // pred_check
      _
    $region3: #{tpu_custom_call.1} parent=1 // pred_check_branch
      %9 = sbr.rel (0) target = $region5
    $region4: #{tpu_custom_call.1} parent=1 // pred_region
      %s11 = ssub.s32 2816, 2816
      %12 = vsyncadd [#allocation3], %s11
      %s13 = sshll.u32 [#allocation2], 4
      %s14 = int_to_ptr.vmem [resolvable:$true] %s13
      %19 = dma.hbm_to_vmem [thread:$0]  %s0, 2816, %s14, [#allocation3], 128, 128, 8
    $region5: #{tpu_custom_call.1} parent=1 // pred_fallthru
      _
    // Predicated region
    $region6: #{tpu_custom_call.1} parent=1 // pred_check
      _
    $region7: #{tpu_custom_call.1} parent=1 // pred_check_branch
      %21 = sbr.rel (0) target = $region9
    $region8: #{tpu_custom_call.1} parent=1 // pred_region
      %22 = dma.done [#allocation3], 2816
    $region9: #{tpu_custom_call.1} parent=1 // pred_fallthru
      _
    %p23 = scmp.eq.s32.totalorder 0, 0
    // Predicated region
    $region10: #{tpu_custom_call.1} parent=1 // pred_check
      %p24 = pneg %p23
    $region11: #{tpu_custom_call.1} parent=1 // pred_check_branch
      %26 = sbr.rel (%p24) target = $region13
    $region12: #{tpu_custom_call.1} parent=1 // pred_region
      %27 = vst [vmem:[#allocation5] sm:$0xff] 0.0
      %28 = vst [vmem:[#allocation5 + $0x8] sm:$0xff] 0.0
      %29 = vst [vmem:[#allocation5 + $0x10] sm:$0xff] 0.0
    $region13: #{tpu_custom_call.1} parent=1 // pred_fallthru
      _
    %v30 = vld [vmem:[#allocation2] sm:$0xff]
    %v31 = vld [vmem:[#allocation2 + $0x8] sm:$0xff]
    %s32 = scalar_lea.vmem [#allocation2], 16
    %v33 = vld [vmem:[%s32] sm:$0xff]
    %v34 = vld [vmem:[%s32 + $0x8] sm:$0xff]
    %s35 = scalar_lea.vmem [#allocation2], 32
    %v36 = vld [vmem:[%s35] sm:$0xff]
    %s37 = scalar_lea.vmem [#allocation2], 72
    %v38 = vld [vmem:[%s37] sm:$0xff]
    %v39 = vld [vmem:[%s37 + $0x8] sm:$0xff]
    %s40 = scalar_lea.vmem [#allocation2], 88
    %v41 = vld [vmem:[%s40] sm:$0xff]
    %v42 = vld [vmem:[%s40 + $0x8] sm:$0xff]
    %s43 = scalar_lea.vmem [#allocation2], 104
    %v44 = vld [vmem:[%s43] sm:$0xff]
    %v45 = vld [vmem:[%s43 + $0x8] sm:$0xff]
    %s46 = scalar_lea.vmem [#allocation2], 152
    %v47 = vld [vmem:[%s46] sm:$0xff]
    %s48 = scalar_lea.vmem [#allocation2], 160
    %v49 = vld [vmem:[%s48] sm:$0xff]
    %s50 = scalar_lea.vmem [#allocation2], 168
    %v51 = vld [vmem:[%s50] sm:$0xff]
    %v52 = vxor.u32 %v30, 2147483648
    %v53 = vxor.u32 %v31, 2147483648
    %v54 = vmul.f32 %v52, 1.442695
    %v55 = vpow.pop %v54
    %v56 = vmul.f32 %v53, 1.442695
    %v57 = vpow.pop %v56
    %v58 = vadd.f32 %v55, 1.0
    %v59 = vadd.f32 %v57, 1.0
    %v60 = vrcp.pop %v58
    %v61 = vmul.f32 1.0, %v60
    %v62 = vrcp.pop %v59
    %v63 = vmul.f32 1.0, %v62
    %v64 = vmul.f32 %v61, 2.0
    %v65 = vmul.f32 %v63, 2.0
    %v66 = vsub.f32 %v64, 0.5
    %v67 = vsub.f32 %v65, 0.5
    %v68 = vxor.u32 %v33, 2147483648
    %v69 = vxor.u32 %v34, 2147483648
    %v70 = vmul.f32 %v68, 1.442695
    %v71 = vpow.pop %v70
    %v72 = vmul.f32 %v69, 1.442695
    %v73 = vpow.pop %v72
    %v74 = vadd.f32 %v71, 1.0
    %v75 = vadd.f32 %v73, 1.0
    %v76 = vrcp.pop %v74
    %v77 = vmul.f32 1.0, %v76
    %v78 = vrcp.pop %v75
    %v79 = vmul.f32 1.0, %v78
    %v80 = vmul.f32 %v77, 2.0
    %v81 = vmul.f32 %v79, 2.0
    %v82 = vmul.f32 %v80, %v80
    %v83 = vmul.f32 %v81, %v81
    %v84 = vmul.f32 %v82, %v44
    %v85 = vmul.f32 %v83, %v45
    %v86 = vmul.f32 %v84, 0.5
    %v87 = vmul.f32 %v85, 0.5
    %v88 = vsub.f32 %v66, %v86
    %v89 = vsub.f32 %v67, %v87
    %v90 = vadd.f32 %v66, %v86
    %v91 = vadd.f32 %v67, %v87
    %v92 = vmul.f32 %v41, 0.5
    %v93 = vmul.f32 %v42, 0.5
    %v94 = vsub.f32 %v38, %v92
    %v95 = vsub.f32 %v39, %v93
    %v96 = vadd.f32 %v38, %v92
    %v97 = vadd.f32 %v39, %v93
    %v98 = vmin.f32 %v90, %v96
    %v99 = vmin.f32 %v91, %v97
    %v100 = vmax.f32 %v88, %v94
    %v101 = vmax.f32 %v89, %v95
    %v102 = vsub.f32 %v98, %v100
    %v103 = vsub.f32 %v99, %v101
    %v104 = vmax.f32 %v102, 0.0
    %v105 = vmax.f32 %v103, 0.0
    %v106 = vmul.f32 %v104, %v105
    %v107 = vadd.f32 %v85, 1e-09
    %v108 = vadd.f32 %v42, 1e-09
    %v109 = vmul.f32 %v84, %v107
    %v110 = vmul.f32 %v41, %v108
    %v111 = vadd.f32 %v109, %v110
    %v112 = vsub.f32 %v111, %v106
    %v113 = vadd.f32 %v112, 1e-09
    %v114 = vrcp.pop %v113
    %v115 = vmul.f32 %v113, %v114
    %v116 = vsub.f32 2.0, %v115
    %v117 = vmul.f32 %v114, %v116
    %v118 = vmul.f32 %v106, %v117
    %v119 = vmax.f32 %v90, %v96
    %v120 = vmax.f32 %v91, %v97
    %v121 = vmin.f32 %v88, %v94
    %v122 = vmin.f32 %v89, %v95
    %v123 = vsub.f32 %v119, %v121
    %v124 = vsub.f32 %v120, %v122
    %v125 = vmul.f32 %v123, %v123
    %v126 = vmul.f32 %v124, %v124
    %v127 = vadd.f32 %v125, %v126
    %v128 = vadd.f32 %v127, 1e-09
    %v129 = vadd.f32 %v94, %v96
    %v130 = vadd.f32 %v95, %v97
    %v131 = vadd.f32 %v88, %v90
    %v132 = vadd.f32 %v89, %v91
    %v133 = vsub.f32 %v129, %v131
    %v134 = vsub.f32 %v130, %v132
    %v135 = vmul.f32 %v133, %v133
    %v136 = vmul.f32 %v134, %v134
    %v137 = vadd.f32 %v135, %v136
    %v138 = vmul.f32 %v137, 0.25
    %v139 = vmul.f32 %v41, %v107
    %v140 = vmul.f32 %v84, %v108
    %v141 = vsub.f32 %v139, %v140
    %v142 = vand.u32 2147483647, %v141
    %v143 = vmul.f32 %v107, %v108
    %v144 = vmul.f32 %v84, %v41
    %v145 = vadd.f32 %v143, %v144
    %v146 = vrcp.pop %v145
    %v147 = vmul.f32 %v145, %v146
    %v148 = vsub.f32 2.0, %v147
    %v149 = vmul.f32 %v146, %v148
    %v150 = vmul.f32 %v142, %v149
    %vm151 = vcmp.gt.f32.partialorder %v150, 1.0
    %v152 = vmax.f32 %v150, 1e-30
    %v153 = vrcp.pop %v152
    %v154 = vmul.f32 %v152, %v153
    %v155 = vsub.f32 2.0, %v154
    %v156 = vmul.f32 %v153, %v155
    %v157 = vsel %vm151, %v156, %v150
    %v158 = vmul.f32 %v157, %v157
    %v159 = vadd.f32 %v158, 1.0
    %v160 = vrsqrt.pop %v159
    %v161 = vmul.f32 %v159, %v160
    %vm162 = vcmp.eq.f32.partialorder %v159, inf
    %v163 = vsel %vm162, %v159, %v161
    %vm164 = vcmp.eq.f32.partialorder %v159, 0.0
    %v165 = vand.u32 %v159, 2147483648
    %v166 = vsel %vm164, %v165, %v163
    %v167 = vadd.f32 %v166, 1.0
    %v168 = vrcp.pop %v167
    %v169 = vmul.f32 %v167, %v168
    %v170 = vsub.f32 2.0, %v169
    %v171 = vmul.f32 %v168, %v170
    %v172 = vmul.f32 %v157, %v171
    %v173 = vmul.f32 %v172, %v172
    %v174 = vadd.f32 %v173, 1.0
    %v175 = vrsqrt.pop %v174
    %v176 = vmul.f32 %v174, %v175
    %vm177 = vcmp.eq.f32.partialorder %v174, inf
    %v178 = vsel %vm177, %v174, %v176
    %vm179 = vcmp.eq.f32.partialorder %v174, 0.0
    %v180 = vand.u32 %v174, 2147483648
    %v181 = vsel %vm179, %v180, %v178
    %v182 = vadd.f32 %v181, 1.0
    %v183 = vrcp.pop %v182
    %v184 = vmul.f32 %v182, %v183
    %v185 = vsub.f32 2.0, %v184
    %v186 = vmul.f32 %v183, %v185
    %v187 = vmul.f32 %v172, %v186
    %v188 = vmul.f32 %v187, %v187
    %v189 = vrcp.pop 9.0
    %v190 = vmul.f32 %v188, %v189
    %v191 = vadd.f32 %v190, -0.14285715
    %v192 = vmul.f32 %v188, %v191
    %v193 = vadd.f32 %v192, 0.2
    %v194 = vmul.f32 %v188, %v193
    %v195 = vadd.f32 %v194, -0.33333334
    %v196 = vmul.f32 %v188, %v195
    %v197 = vadd.f32 %v196, 1.0
    %v198 = vmul.f32 %v187, %v197
    %v199 = vmul.f32 %v198, 4.0
    %v200 = vsub.f32 1.5707964, %v199
    %v201 = vsel %vm151, %v200, %v199
    %v202 = vmul.f32 %v201, 0.40528473
    %v203 = vmul.f32 %v202, %v201
    %v204 = vsub.f32 %v203, %v118
    %v205 = vadd.f32 %v204, 1.0
    %v206 = vrcp.pop %v205
    %v207 = vmul.f32 %v205, %v206
    %v208 = vsub.f32 2.0, %v207
    %v209 = vmul.f32 %v206, %v208
    %v210 = vmul.f32 %v203, %v209
    %v211 = vrcp.pop %v128
    %v212 = vmul.f32 %v128, %v211
    %v213 = vsub.f32 2.0, %v212
    %v214 = vmul.f32 %v211, %v213
    %v215 = vmul.f32 %v138, %v214
    %v216 = vmul.f32 %v203, %v210
    %v217 = vadd.f32 %v215, %v216
    %v218 = vsub.f32 %v118, %v217
    %vm219 = vcmp.gt.f32.partialorder %v51, 0.0
    %v220 = vsub.f32 1.0, %v218
    %v221 = vmul.f32 %v47, %v220
    %v222 = vsel %vm219, %v221, 0.0
    %v223 = vmax.f32 %v218, 0.0
    %v224 = vadd.f32 %v223, 0.0
    %v225 = vsub.f32 0.0, %v36
    %v226 = vmul.f32 %v225, %v224
    %v227 = vmul.f32 %v51, %v226
    %v228 = vsel %vm219, %v227, 0.0
    %v229 = vld [vmem:[#allocation5] sm:$0xff]
    %v230 = vadd.f32 %v229, %v222
    %231 = vst [vmem:[#allocation5] sm:$0xff] %v230
    %s232 = scalar_lea.vmem [#allocation5], 16
    %v233 = vld [vmem:[%s232] sm:$0xff]
    %v234 = vadd.f32 %v233, %v228
    %235 = vst [vmem:[%s232] sm:$0xff] %v234
    %s236 = scalar_lea.vmem [#allocation2], 40
    %v237 = vld [vmem:[%s236] sm:$0xff]
    %v238 = vld [vmem:[%s236 + $0x8] sm:$0xff]
    %v239 = vld [vmem:[%s236 + $0x10] sm:$0xff]
    %v240 = vld [vmem:[%s236 + $0x18] sm:$0xff]
    %s241 = scalar_lea.vmem [#allocation2], 120
    %v242 = vld [vmem:[%s241] sm:$0xff]
    %v243 = vld [vmem:[%s241 + $0x8] sm:$0xff]
    %v244 = vld [vmem:[%s241 + $0x10] sm:$0xff]
    %v245 = vld [vmem:[%s241 + $0x18] sm:$0xff]
    %v246 = vmax.f32 %v237, 0.0
    %v247 = vmax.f32 %v238, 0.0
    %v248 = vmax.f32 %v239, 0.0
    %v249 = vmax.f32 %v240, 0.0
    %v250 = vmul.f32 %v237, %v242
    %v251 = vmul.f32 %v238, %v243
    %v252 = vmul.f32 %v239, %v244
    %v253 = vmul.f32 %v240, %v245
    %v254 = vsub.f32 %v246, %v250
    %v255 = vsub.f32 %v247, %v251
    %v256 = vsub.f32 %v248, %v252
    %v257 = vsub.f32 %v249, %v253
    %v258 = vand.u32 2147483647, %v237
    %v259 = vand.u32 2147483647, %v238
    %v260 = vand.u32 2147483647, %v239
    %v261 = vand.u32 2147483647, %v240
    %v262 = vsub.f32 0.0, %v258
    %v263 = vsub.f32 0.0, %v259
    %v264 = vsub.f32 0.0, %v260
    %v265 = vsub.f32 0.0, %v261
    %v266 = vmul.f32 %v262, 1.442695
    %v267 = vpow.pop %v266
    %v268 = vmul.f32 %v263, 1.442695
    %v269 = vpow.pop %v268
    %v270 = vmul.f32 %v264, 1.442695
    %v271 = vpow.pop %v270
    %v272 = vmul.f32 %v265, 1.442695
    %v273 = vpow.pop %v272
    %v274 = vadd.f32 %v267, 1.0
    %v275 = vadd.f32 %v269, 1.0
    %v276 = vadd.f32 %v271, 1.0
    %v277 = vadd.f32 %v273, 1.0
    %v278 = vlog2.pop %v274
    %v279 = vmul.f32 %v278, 0.6931472
    %v280 = vlog2.pop %v275
    %v281 = vmul.f32 %v280, 0.6931472
    %v282 = vlog2.pop %v276
    %v283 = vmul.f32 %v282, 0.6931472
    %v284 = vlog2.pop %v277
    %v285 = vmul.f32 %v284, 0.6931472
    %v286 = vadd.f32 %v254, %v279
    %v287 = vadd.f32 %v255, %v281
    %v288 = vadd.f32 %v256, %v283
    %v289 = vadd.f32 %v257, %v285
    %v290 = vadd.f32 %v286, %v287
    %v291 = vadd.f32 %v290, %v288
    %v292 = vadd.f32 %v291, %v289
    %s293 = scalar_lea.vmem [#allocation5], 8
    %v294 = vld [vmem:[%s293] sm:$0xff]
    %v295 = vmul.f32 %v49, %v292
    %v296 = vsel %vm219, %v295, 0.0
    %v297 = vadd.f32 %v294, %v296
    %298 = vst [vmem:[%s293] sm:$0xff] %v297
    // Predicated region
    $region14: #{tpu_custom_call.1} parent=1 // pred_check
      _
    $region15: #{tpu_custom_call.1} parent=1 // pred_check_branch
      %300 = sbr.rel (0) target = $region17
    $region16: #{tpu_custom_call.1} parent=1 // pred_region
      %s302 = ssub.s32 384, 384
      %303 = vsyncadd [#allocation4], %s302
      %s304 = sshll.u32 [#allocation5], 4
      %s305 = int_to_ptr.vmem [resolvable:$true] %s304
      %310 = dma.vmem_to_hbm [thread:$0]  %s305, 384, %s1, [#allocation4], 128, 128, 8
    $region17: #{tpu_custom_call.1} parent=1 // pred_fallthru
      _
    // Predicated region
    $region18: #{tpu_custom_call.1} parent=1 // pred_check
      _
    $region19: #{tpu_custom_call.1} parent=1 // pred_check_branch
      %312 = sbr.rel (0) target = $region21
    $region20: #{tpu_custom_call.1} parent=1 // pred_region
      %313 = dma.done [#allocation4], 384
    $region21: #{tpu_custom_call.1} parent=1 // pred_fallthru
      _
    %314 = vsyncpa [#allocation3], 1
    %315 = vsyncpa [#allocation4], 1

</llo_original>
